<compile_context>
chip_gen: v5e
topology: v5e:2x2
jax: 0.10.0
libtpu: 0.0.40
codegen_flags: <defaults>
</compile_context>

<pallas_src>
import math
import functools

import numpy as np
import jax
import jax.numpy as jnp
from jax.experimental import pallas as pl
from jax.experimental.pallas import tpu as pltpu


def _vmem_limit_bytes(est_block_bytes):
    """Per-kernel scoped-VMEM limit: double-buffered blocks + headroom, < v7x 64 MiB."""
    return int(min(max(2 * est_block_bytes + (8 << 20), 32 << 20), 56 << 20))


# --------------------------------------------------------------------------------------
# Generic row-tiled linear kernel:  y = x @ W + b   (used for w_q, w_k, w_v, w_o)
# --------------------------------------------------------------------------------------
def _linear_kernel(x_ref, w_ref, b_ref, o_ref, *, mxu_dtype):
    x = x_ref[...].astype(mxu_dtype)                                     # (rows, D_in)
    y = jnp.dot(x, w_ref[...], preferred_element_type=jnp.float32)      # f32 accumulation
    o_ref[...] = (y + b_ref[...]).astype(o_ref.dtype)


def linear(x, w_t, b, *, row_block=256, mxu_dtype=jnp.bfloat16, out_dtype=jnp.float32):
    """x: (B, S, D_in); w_t: (D_in, D_out) (already transposed); b: (1, D_out)."""
    B, S, d_in = x.shape
    d_out = w_t.shape[1]
    rb = min(row_block, S)
    assert S % rb == 0, "sequence length must be divisible by the row block"

    est = 4 * (rb * d_in + d_in * d_out + d_out + rb * d_out)
    kernel = functools.partial(_linear_kernel, mxu_dtype=mxu_dtype)
    return pl.pallas_call(
        kernel,
        out_shape=jax.ShapeDtypeStruct((B, S, d_out), out_dtype),
        grid=(B, S // rb),
        in_specs=[
            pl.BlockSpec((None, rb, d_in), lambda bb, t: (bb, t, 0)),
            pl.BlockSpec((d_in, d_out), lambda bb, t: (0, 0)),     # resident weight
            pl.BlockSpec((1, d_out), lambda bb, t: (0, 0)),        # resident bias
        ],
        out_specs=pl.BlockSpec((None, rb, d_out), lambda bb, t: (bb, t, 0)),
        compiler_params=pltpu.CompilerParams(
            dimension_semantics=("parallel", "parallel"),
            vmem_limit_bytes=_vmem_limit_bytes(est)),
        # TODO(synk): for D >= 4096 add a K-tiling "arbitrary" grid axis streaming the weight.
    )(x, w_t.astype(mxu_dtype), b.astype(jnp.float32))


# --------------------------------------------------------------------------------------
# Attention kernel: one (batch, head, q-tile) per grid step.
# Inputs are token-major (B, S, D); the head is a dk-wide lane block selected by the
# BlockSpec index map.  q/k are de-interleaved per head ([reals | imags]); RoPE is one
# lane roll (XLU) + two FMAs (VPU).  K-side RoPE cached per (b, h) in VMEM scratch.
# --------------------------------------------------------------------------------------
def _attention_kernel(q_ref, k_ref, v_ref, cos_ref, sin_ref, o_ref, k_rot_ref,
                      *, scale, q_block, mxu_dtype, approx_recip):
    dk = q_ref.shape[-1]
    half = dk // 2
    tq = q_block
    t = pl.program_id(2)
    row0 = pl.multiple_of(t * tq, tq)

    def rope(x, cos, sin):
        # x is [re | im] per head; rolling by d_k/2 swaps the halves (direction-agnostic
        # since the shift is exactly half); sin carries the [-s | +s] signs.
        return x * cos + pltpu.roll(x, shift=half, axis=1) * sin

    # K-side RoPE hoisted out of the q-tile loop: computed once per (b, h).
    @pl.when(t == 0)
    def _():
        k = k_ref[...].astype(jnp.float32)                               # (S, dk)
        k_rot_ref[...] = rope(k, cos_ref[...], sin_ref[...]).astype(k_rot_ref.dtype)

    # q RoPE in f32; fold 1/sqrt(d_k) into the (tq, dk) q tile, not the (tq, S) scores.
    q = rope(q_ref[...].astype(jnp.float32),
             cos_ref[pl.ds(row0, tq), :], sin_ref[pl.ds(row0, tq), :]) * scale

    scores = jax.lax.dot_general(
        q.astype(mxu_dtype), k_rot_ref[...],
        (((1,), (1,)), ((), ())), preferred_element_type=jnp.float32)    # (tq, S)

    # Causal mask generated in-kernel (hard replacement == reference's masked_fill).
    row = row0 + jax.lax.broadcasted_iota(jnp.int32, scores.shape, 0)
    col = jax.lax.broadcasted_iota(jnp.int32, scores.shape, 1)
    scores = jnp.where(col <= row, scores, jnp.float32(-1e9))

    # Numerically stable softmax in f32, normalization deferred past probs @ V.
    m = jnp.max(scores, axis=-1, keepdims=True)
    e = jnp.exp(scores - m)                                              # (tq, S), <= 1
    denom = jnp.sum(e, axis=-1, keepdims=True)                           # (tq, 1)

    ctx = jnp.dot(e.astype(mxu_dtype), v_ref[...].astype(mxu_dtype),
                  preferred_element_type=jnp.float32)                    # (tq, dk)
    if approx_recip:
        ctx = ctx * pl.reciprocal(denom, approx=True)                    # EUP, off the VALU
    else:
        ctx = ctx / denom
    # TODO(synk): attention-prob dropout not implemented (eval / p=0 semantics).
    o_ref[...] = ctx.astype(o_ref.dtype)


def attention(q_tm, k_tm, v_tm, cos_cat, sin_pm, n_heads, *,
              q_block=256, mxu_dtype=jnp.bfloat16, approx_recip=True,
              out_dtype=jnp.float32):
    """q/k/v_tm: token-major (B, S, D) projections; cos_cat/sin_pm: (S, d_k)."""
    B, S, D = q_tm.shape
    dk = D // n_heads
    assert dk % 2 == 0
    assert dk % 128 == 0, "d_k must be a multiple of 128 for lane-dense head blocks"
    tq = min(q_block, S)
    assert S % tq == 0

    kernel = functools.partial(
        _attention_kernel, scale=1.0 / math.sqrt(dk), q_block=tq,
        mxu_dtype=mxu_dtype, approx_recip=approx_recip)

    # double-buffered input/output blocks + K-rope scratch + (tq, S) f32 intermediates
    est = 4 * (2 * tq * dk + 3 * S * dk + 2 * S * dk) + 4 * 3 * tq * S
    return pl.pallas_call(
        kernel,
        out_shape=jax.ShapeDtypeStruct((B, S, D), out_dtype),
        grid=(B, n_heads, S // tq),
        in_specs=[
            pl.BlockSpec((None, tq, dk), lambda b, h, t: (b, t, h)),   # q head tile
            pl.BlockSpec((None, S, dk), lambda b, h, t: (b, 0, h)),    # k head (full S, resident)
            pl.BlockSpec((None, S, dk), lambda b, h, t: (b, 0, h)),    # v head (full S, resident)
            pl.BlockSpec((S, dk), lambda b, h, t: (0, 0)),             # cos table (resident)
            pl.BlockSpec((S, dk), lambda b, h, t: (0, 0)),             # sin table (resident)
        ],
        out_specs=pl.BlockSpec((None, tq, dk), lambda b, h, t: (b, t, h)),
        scratch_shapes=[pltpu.VMEM((S, dk), mxu_dtype)],               # roped K, per (b, h)
        compiler_params=pltpu.CompilerParams(
            # B/H leading "parallel" axes (megacore sharding keeps per-core K/V resident);
            # the q-tile axis is "arbitrary" because of the K-rope scratch init at t == 0.
            dimension_semantics=("parallel", "parallel", "arbitrary"),
            vmem_limit_bytes=_vmem_limit_bytes(est)),
        # TODO(synk): flash-style KV-tile grid axis for long S / v7x 64 MiB VMEM.
    )(q_tm, k_tm, v_tm, cos_cat, sin_pm)


# --------------------------------------------------------------------------------------
# Full forward pass (matches MultiHeadAttentionLLAMA.forward with a causal mask)
# --------------------------------------------------------------------------------------
def mha_llama_forward(q, k, v, mask2d, cos_half, sin_half, params, n_heads, *,
                      q_block=256, row_block=256, mxu_dtype=jnp.bfloat16,
                      approx_recip=True):
    del mask2d  # causal mask is generated in-kernel (see TODO at top for arbitrary masks)
    B, S, D = q.shape
    dk = D // n_heads
    half = dk // 2
    wq_t, bq, wk_t, bk, wv_t, bv, wo_t, bo = params

    # Fold the RoPE pair de-interleave into the q/k projection weights (per head:
    # [re_0..re_{f-1} | im_0..im_{f-1}]).  The within-head permutation cancels in q.k,
    # so scores are identical to the interleaved formulation.
    perm = np.arange(D).reshape(n_heads, half, 2).transpose(0, 2, 1).reshape(D)
    wq_d, bq_d = wq_t[:, perm], bq[:, perm]
    wk_d, bk_d = wk_t[:, perm], bk[:, perm]

    # bf16 q/k/v projections halve the HBM traffic into attention (f32 for the exact path).
    proj_dtype = mxu_dtype
    lin = functools.partial(linear, row_block=row_block, mxu_dtype=mxu_dtype)
    q_p = lin(q, wq_d, bq_d, out_dtype=proj_dtype)   # (B, S, D), de-interleaved per head
    k_p = lin(k, wk_d, bk_d, out_dtype=proj_dtype)
    v_p = lin(v, wv_t, bv, out_dtype=proj_dtype)     # original per-head layout (no RoPE on v)

    # RoPE tables for the de-interleaved layout.
    cos_cat = jnp.concatenate([cos_half, cos_half], axis=1).astype(jnp.float32)   # (S, dk)
    sin_pm = jnp.concatenate([-sin_half, sin_half], axis=1).astype(jnp.float32)   # (S, dk)

    ctx = attention(q_p, k_p, v_p, cos_cat, sin_pm, n_heads,
                    q_block=q_block, mxu_dtype=mxu_dtype,
                    approx_recip=approx_recip, out_dtype=proj_dtype)   # (B, S, D) token-major

    return lin(ctx, wo_t, bo, out_dtype=jnp.float32)   # single full-D output projection


# ---------------- pure-JAX reference (mirrors the PyTorch forward) ----------------
def mha_llama_reference(q, k, v, mask2d, cos_half, sin_half, params, n_heads):
    B, S, D = q.shape
    dk = D // n_heads
    wq_t, bq, wk_t, bk, wv_t, bv, wo_t, bo = params

    qp = q @ wq_t + bq
    kp = k @ wk_t + bk
    vp = v @ wv_t + bv

    def rope(x):  # x: (B, S, H, dk), interleaved pairs
        xh = x.reshape(B, S, n_heads, dk // 2, 2)
        a, b2 = xh[..., 0], xh[..., 1]
        c = cos_half[None, :, None, :]
        s = sin_half[None, :, None, :]
        return jnp.stack([a * c - b2 * s, a * s + b2 * c], axis=-1).reshape(
            B, S, n_heads, dk)

    qh = rope(qp.reshape(B, S, n_heads, dk)).transpose(0, 2, 1, 3)
    kh = rope(kp.reshape(B, S, n_heads, dk)).transpose(0, 2, 1, 3)
    vh = vp.reshape(B, S, n_heads, dk).transpose(0, 2, 1, 3)

    scores = jnp.einsum('bhqd,bhkd->bhqk', qh, kh) / math.sqrt(dk)
    scores = jnp.where(mask2d[None, None] == 0, -1e9, scores)
    m = jnp.max(scores, axis=-1, keepdims=True)
    e = jnp.exp(scores - m)
    probs = e / jnp.sum(e, axis=-1, keepdims=True)
    ctx = jnp.einsum('bhqk,bhkd->bhqd', probs, vh)
    ctx = ctx.transpose(0, 2, 1, 3).reshape(B, S, D)
    return ctx @ wo_t + bo


if __name__ == "__main__":
    B, S, D, H = 2, 256, 256, 2
    dk = D // H                      # 128 -> lane-dense head blocks
    half = dk // 2

    key = jax.random.PRNGKey(0)
    keys = jax.random.split(key, 11)

    q = jax.random.normal(keys[0], (B, S, D), jnp.float32)
    k = jax.random.normal(keys[1], (B, S, D), jnp.float32)
    v = jax.random.normal(keys[2], (B, S, D), jnp.float32)

    # nn.Linear(d_model, d_model) x4; pass weights pre-transposed as (D_in, D_out)
    def lin_params(kw, kb):
        w = jax.random.normal(kw, (D, D), jnp.float32) * 0.1   # PyTorch (out, in)
        b = jax.random.normal(kb, (1, D), jnp.float32) * 0.1
        return w.T, b

    wq_t, bq = lin_params(keys[3], keys[4])
    wk_t, bk = lin_params(keys[5], keys[6])
    wv_t, bv = lin_params(keys[7], keys[8])
    wo_t, bo = lin_params(keys[9], keys[10])
    params = (wq_t, bq, wk_t, bk, wv_t, bv, wo_t, bo)

    # causal mask (1 = keep, 0 = masked) -- used by the reference; the kernel generates
    # the same causal mask in-kernel via broadcasted_iota.
    mask2d = jnp.tril(jnp.ones((S, S), jnp.float32))

    # freqs_complex equivalent: angle[m, i] = m * 10000^(-2i/dk)
    inv_freq = 1.0 / (10000.0 ** (np.arange(0, dk, 2, dtype=np.float32) / dk))  # (dk/2,)
    pos = np.arange(S, dtype=np.float32)
    angles = np.outer(pos, inv_freq)                       # (S, dk/2)
    cos_half = jnp.asarray(np.cos(angles))
    sin_half = jnp.asarray(np.sin(angles))

    with jax.default_matmul_precision("highest"):
        ref = mha_llama_reference(q, k, v, mask2d, cos_half, sin_half, params, H)
    ref = jax.block_until_ready(ref)
    ref_np = np.asarray(ref)

    # Exact path: f32 MXU operands + exact division; 128-wide tiles exercise multi-tile
    # q iteration and the K-rope scratch reuse.  Tight correctness check.
    out_f32 = mha_llama_forward(q, k, v, mask2d, cos_half, sin_half, params, H,
                                q_block=128, row_block=128,
                                mxu_dtype=jnp.float32, approx_recip=False)
    out_f32 = jax.block_until_ready(out_f32)
    np.testing.assert_allclose(np.asarray(out_f32), ref_np, rtol=2e-3, atol=2e-3)

    # Production fast path (defaults): bf16 MXU operands / bf16 intermediates, f32
    # accumulation + softmax, EUP approx reciprocal, 256-wide tiles (v6e/v7x sizing).
    # Accepted tolerance for bf16 end-to-end is loose by design (documented, not a bug).
    out_bf16 = mha_llama_forward(q, k, v, mask2d, cos_half, sin_half, params, H)
    out_bf16 = jax.block_until_ready(out_bf16)
    out_bf16_np = np.asarray(out_bf16)
    np.testing.assert_allclose(out_bf16_np, ref_np, rtol=1e-1, atol=3.5e-1)
    assert float(np.mean(np.abs(out_bf16_np - ref_np))) < 5e-2, "bf16 path mean error too large"

    print("KERNEL_OK")
</pallas_src>

<mosaic_0001>
module attributes {stable_mosaic.version = 11 : i64} {
  func.func @_linear_kernel(%arg0: i32, %arg1: i32, %arg2: memref<1x128x256xf32, #tpu.memory_space<vmem>>, %arg3: memref<256x256xf32, #tpu.memory_space<vmem>>, %arg4: memref<1x256xf32, #tpu.memory_space<vmem>>, %arg5: memref<1x128x256xf32, #tpu.memory_space<vmem>>) attributes {dimension_semantics = [#tpu.dimension_semantics<parallel>, #tpu.dimension_semantics<parallel>], iteration_bounds = array<i64: 2, 2>, scalar_prefetch = 0 : i64, scratch_operands = 0 : i64, tpu.core_type = #tpu.core_type<tc>, window_params = [{transform_indices = @transform_0, window_bounds = array<i64: 1, 128, 256>}, {pipeline_mode = #tpu.pipeline_mode<synchronous>, transform_indices = @transform_1, window_bounds = array<i64: 256, 256>}, {pipeline_mode = #tpu.pipeline_mode<synchronous>, transform_indices = @transform_2, window_bounds = array<i64: 1, 256>}, {transform_indices = @transform_3, window_bounds = array<i64: 1, 128, 256>}]} {
    %c0 = arith.constant 0 : index
    %c0_0 = arith.constant 0 : index
    %c0_1 = arith.constant 0 : index
    %0 = vector.load %arg2[%c0, %c0_0, %c0_1] : memref<1x128x256xf32, #tpu.memory_space<vmem>>, vector<1x128x256xf32>
    %1 = vector.shape_cast %0 : vector<1x128x256xf32> to vector<128x256xf32>
    %c0_2 = arith.constant 0 : index
    %c0_3 = arith.constant 0 : index
    %2 = vector.load %arg3[%c0_2, %c0_3] : memref<256x256xf32, #tpu.memory_space<vmem>>, vector<256x256xf32>
    %cst = arith.constant dense<0.000000e+00> : vector<128x256xf32>
    %3 = tpu.matmul %1, %2, %cst {dimension_numbers = #tpu.dot_dimension_numbers<[1], [0], [0], [1], [0, 0, 1, 1], [], []>} : vector<128x256xf32>, vector<256x256xf32>, vector<128x256xf32> -> vector<128x256xf32>
    %c0_4 = arith.constant 0 : index
    %c0_5 = arith.constant 0 : index
    %4 = vector.load %arg4[%c0_4, %c0_5] : memref<1x256xf32, #tpu.memory_space<vmem>>, vector<1x256xf32>
    %5 = vector.broadcast %4 : vector<1x256xf32> to vector<128x256xf32>
    %6 = arith.addf %3, %5 : vector<128x256xf32>
    %c0_6 = arith.constant 0 : index
    %c0_7 = arith.constant 0 : index
    %c0_8 = arith.constant 0 : index
    %7 = vector.load %arg5[%c0_6, %c0_7, %c0_8] : memref<1x128x256xf32, #tpu.memory_space<vmem>>, vector<1x128x256xf32>
    %8 = vector.shape_cast %7 : vector<1x128x256xf32> to vector<128x256xf32>
    %9 = vector.shape_cast %6 : vector<128x256xf32> to vector<1x128x256xf32>
    tpu.vector_store %arg5[%c0_6, %c0_7, %c0_8], %9 {strides = array<i32>} : memref<1x128x256xf32, #tpu.memory_space<vmem>>, vector<1x128x256xf32>,
    return
  }
  func.func @transform_0(%arg0: i32, %arg1: i32) -> (i32, i32, i32) {
    %c0_i32 = arith.constant 0 : i32
    %c0_i32_0 = arith.constant 0 : i32
    return %arg0, %arg1, %c0_i32 : i32, i32, i32
  }
  func.func @transform_1(%arg0: i32, %arg1: i32) -> (i32, i32) {
    %c0_i32 = arith.constant 0 : i32
    %c0_i32_0 = arith.constant 0 : i32
    %c0_i32_1 = arith.constant 0 : i32
    return %c0_i32, %c0_i32_0 : i32, i32
  }
  func.func @transform_2(%arg0: i32, %arg1: i32) -> (i32, i32) {
    %c0_i32 = arith.constant 0 : i32
    %c0_i32_0 = arith.constant 0 : i32
    %c0_i32_1 = arith.constant 0 : i32
    return %c0_i32, %c0_i32_0 : i32, i32
  }
  func.func @transform_3(%arg0: i32, %arg1: i32) -> (i32, i32, i32) {
    %c0_i32 = arith.constant 0 : i32
    %c0_i32_0 = arith.constant 0 : i32
    return %arg0, %arg1, %c0_i32 : i32, i32, i32
  }
}

</mosaic_0001>

<llo_original>
// kernel: tpu_custom_call.1
$region0: #{tpu_custom_call.1}
  #allocation0 [shape = 'u32[]', space=smem, size = 0x4, offset = 0x4, fixed_abs, tag = 'smem constant byte address 0x4 - core index']
  #allocation1 [shape = 'u32[72,128]{1,0:T(1,128)}', space=vmem, size = 0x9000, scoped, tag = 'internal scratch']
  %s0 = inlined_call_operand.hbm [shape: f32[2,256,256], index: 0, kind: input, shape index: {}]
  %s1 = inlined_call_operand.hbm [shape: f32[256,256], index: 1, kind: input, shape index: {}]
  %s2 = inlined_call_operand.hbm [shape: f32[1,256], index: 2, kind: input, shape index: {}]
  %s3 = inlined_call_operand.hbm [shape: f32[2,256,256], index: 3, kind: output, shape index: {}]
  %s4 = sld [smem:[#allocation0]]
  $region57: #{tpu_custom_call.1} parent=0
    _
  %s6 = ssub.s32 1, %s4
  %s7 = scalar_select 0, %s6, %s4
  $region1: #{tpu_custom_call.1} parent=0
    #allocation2 [shape = 'u8[262144]{0}', space=vmem, size = 0x40000, scoped, tag = 'input window, operand 0']
    #allocation3 [shape = 's32[2]{0}', space=sflag, size = 0x8, scoped, tag = 'scoped memory for tpu_custom_call.1']
    #allocation4 [shape = 's32[2]{0}', space=sflag, size = 0x8, scoped, tag = 'scoped memory for tpu_custom_call.1']
    #allocation5 [shape = 'u8[262144]{0}', space=vmem, size = 0x40000, scoped, tag = 'input window, operand 1, single buffered']
    #allocation6 [shape = 's32[1]{0}', space=sflag, size = 0x4, scoped, tag = 'scoped memory for tpu_custom_call.1']
    #allocation7 [shape = 'u8[1024]{0}', space=vmem, size = 0x400, scoped, tag = 'input window, operand 2, single buffered']
    #allocation8 [shape = 'u8[262144]{0}', space=vmem, size = 0x40000, scoped, tag = 'output window, operand 0']
    %8 = vsyncpa [#allocation3], 0
    %s9 = scalar_lea.sflag [#allocation3], 1
    %10 = vsyncpa %s9, 0
    %11 = vsyncpa [#allocation6], 0
    %12 = vsyncpa [#allocation4], 0
    %s13 = scalar_lea.sflag [#allocation4], 1
    %14 = vsyncpa %s13, 0
    loop: start=0, step=1, limit=6
    $region2: #{tpu_custom_call.1} parent=1 // loop_pre_header
      _
    $region3: #{tpu_custom_call.1} parent=1 // loop_header
      %s16 = sphi 0, %s20
      %p17 = scmp.ge.s32.totalorder %s16, 6
      %s23 = sphi 0, %s35
      %s24 = sphi 0, %s31
      %s25 = sphi 0, %s23
      %s26 = sphi 0, %s24
      %s27 = sphi 0, %s25
      %s28 = sphi 0, %s26
      %s40 = sphi 0, %s42
      %s43 = sphi 0, %s40
      %s44 = sphi 0, %s43
      %s60 = sphi 0, %s44
      %s64 = sphi 0, %s64
      %s66 = sphi 0, %s64
      %s67 = sphi 0, %s66
      %s81 = sphi 0, %s67
      %s85 = sphi 0, %s85
      %s87 = sphi 0, %s85
      %s88 = sphi 0, %s87
      %s102 = sphi 0, %s88
      %s110 = sphi 0, %s112
      %s113 = sphi 0, %s110
      %s114 = sphi 0, %s113
      %s130 = sphi 0, %s114
    $region4: #{tpu_custom_call.1} parent=1 // loop_header_branch
      %19 = sbr.rel (%p17) target = $region8
    $region5: #{tpu_custom_call.1} parent=1 // loop_body
      %s21 = ssub.s32 %s16, 1
      %s22 = ssub.s32 %s16, 2
      %s29 = sadd.s32 1, %s24
      %p30 = scmp.ge.s32.totalorder %s29, 2
      %s31 = scalar_select %p30, 0, %s29
      %s32 = sadd.s32 1, %s23
      %s33 = scalar_select %p30, %s32, %s23
      %p34 = scmp.ge.s32.totalorder %s33, 2
      %s35 = scalar_select %p34, 0, %s33
      %s36 = ssub.s32 %s23, %s35
      %s37 = ssub.s32 %s24, %s31
      %s38 = sor.u32 %s36, %s37
      %p39 = scmp.eq.s32.totalorder %s38, 0
      %s41 = sadd.s32 %s40, 1
      %s42 = scalar_select %p39, %s40, %s41
      %p45 = pneg %p39
      %p46 = scmp.eq.s32.totalorder %s16, 3
      %p47 = por %p45, %p46
      %p48 = scmp.ne.s32.totalorder %s40, %s43
      %p49 = scmp.eq.s32.totalorder %s16, 0
      %p50 = por %p48, %p49
      %p51 = scmp.ne.s32.totalorder %s40, %s43
      %p52 = scmp.eq.s32.totalorder %s21, 3
      %p53 = por %p51, %p52
      %p54 = scmp.ne.s32.totalorder %s43, %s44
      %p55 = scmp.eq.s32.totalorder %s21, 0
      %p56 = por %p54, %p55
      %p57 = scmp.ne.s32.totalorder %s43, %s44
      %p58 = scmp.eq.s32.totalorder %s22, 3
      %p59 = por %p57, %p58
      %p61 = scmp.ne.s32.totalorder %s44, %s60
      %p62 = scmp.eq.s32.totalorder %s22, 0
      %p63 = por %p61, %p62
      %s65 = sadd.s32 %s64, 1
      %p68 = scmp.eq.s32.totalorder %s16, 3
      %p69 = scmp.ne.s32.totalorder %s64, %s66
      %p70 = scmp.eq.s32.totalorder %s16, 0
      %p71 = por %p69, %p70
      %p72 = scmp.ne.s32.totalorder %s64, %s66
      %p73 = scmp.eq.s32.totalorder %s21, 3
      %p74 = por %p72, %p73
      %p75 = scmp.ne.s32.totalorder %s66, %s67
      %p76 = scmp.eq.s32.totalorder %s21, 0
      %p77 = por %p75, %p76
      %p78 = scmp.ne.s32.totalorder %s66, %s67
      %p79 = scmp.eq.s32.totalorder %s22, 3
      %p80 = por %p78, %p79
      %p82 = scmp.ne.s32.totalorder %s67, %s81
      %p83 = scmp.eq.s32.totalorder %s22, 0
      %p84 = por %p82, %p83
      %s86 = sadd.s32 %s85, 1
      %p89 = scmp.eq.s32.totalorder %s16, 3
      %p90 = scmp.ne.s32.totalorder %s85, %s87
      %p91 = scmp.eq.s32.totalorder %s16, 0
      %p92 = por %p90, %p91
      %p93 = scmp.ne.s32.totalorder %s85, %s87
      %p94 = scmp.eq.s32.totalorder %s21, 3
      %p95 = por %p93, %p94
      %p96 = scmp.ne.s32.totalorder %s87, %s88
      %p97 = scmp.eq.s32.totalorder %s21, 0
      %p98 = por %p96, %p97
      %p99 = scmp.ne.s32.totalorder %s87, %s88
      %p100 = scmp.eq.s32.totalorder %s22, 3
      %p101 = por %p99, %p100
      %p103 = scmp.ne.s32.totalorder %s88, %s102
      %p104 = scmp.eq.s32.totalorder %s22, 0
      %p105 = por %p103, %p104
      %s106 = ssub.s32 %s23, %s35
      %s107 = ssub.s32 %s24, %s31
      %s108 = sor.u32 %s106, %s107
      %p109 = scmp.eq.s32.totalorder %s108, 0
      %s111 = sadd.s32 %s110, 1
      %s112 = scalar_select %p109, %s110, %s111
      %p115 = pneg %p109
      %p116 = scmp.eq.s32.totalorder %s16, 3
      %p117 = por %p115, %p116
      %p118 = scmp.ne.s32.totalorder %s110, %s113
      %p119 = scmp.eq.s32.totalorder %s16, 0
      %p120 = por %p118, %p119
      %p121 = scmp.ne.s32.totalorder %s110, %s113
      %p122 = scmp.eq.s32.totalorder %s21, 3
      %p123 = por %p121, %p122
      %p124 = scmp.ne.s32.totalorder %s113, %s114
      %p125 = scmp.eq.s32.totalorder %s21, 0
      %p126 = por %p124, %p125
      %p127 = scmp.ne.s32.totalorder %s113, %s114
      %p128 = scmp.eq.s32.totalorder %s22, 3
      %p129 = por %p127, %p128
      %p131 = scmp.ne.s32.totalorder %s114, %s130
      %p132 = scmp.eq.s32.totalorder %s22, 0
      %p133 = por %p131, %p132
      %p134 = scmp.le.s32.totalorder 1, %s16
      %p135 = scmp.lt.s32.totalorder %s16, 5
      %p136 = pnand %p134, %p135
      %p137 = pneg %p136
      // Predicated region
      $region9: #{tpu_custom_call.1} parent=5 // pred_check
        _
      $region10: #{tpu_custom_call.1} parent=5 // pred_check_branch
        %139 = sbr.rel (%p136) target = $region12
      $region11: #{tpu_custom_call.1} parent=5 // pred_region
        %s140 = ssub.s32 %s16, 1
        // Predicated region
        $region13: #{tpu_custom_call.1} parent=11 // pred_check
          %p141 = pneg %p77
        $region14: #{tpu_custom_call.1} parent=11 // pred_check_branch
          %143 = sbr.rel (%p141) target = $region16
        $region15: #{tpu_custom_call.1} parent=11 // pred_region
          %145 = vsyncadd [#allocation6], 0
          %s146 = sshll.u32 %s1, 4
          %s147 = int_to_ptr.hbm [resolvable:$true] %s146
          %s148 = sshll.u32 [#allocation5], 4
          %s149 = int_to_ptr.vmem [resolvable:$true] %s148
          %154 = dma.hbm_to_vmem [thread:$0]  %s147, 8192, %s149, [#allocation6], 256, 256, 16
        $region16: #{tpu_custom_call.1} parent=11 // pred_fallthru
          _
        // Predicated region
        $region17: #{tpu_custom_call.1} parent=11 // pred_check
          %p155 = pneg %p98
        $region18: #{tpu_custom_call.1} parent=11 // pred_check_branch
          %157 = sbr.rel (%p155) target = $region20
        $region19: #{tpu_custom_call.1} parent=11 // pred_region
          %159 = vsyncadd [#allocation6], 0
          %s161 = sshll.u32 %s2, 4
          %s162 = int_to_ptr.hbm [resolvable:$true] %s161
          %s163 = sshll.u32 [#allocation7], 4
          %s164 = int_to_ptr.vmem [resolvable:$true] %s163
          %166 = dma.hbm_to_vmem [thread:$0]  %s162, 32, %s164, [#allocation6]
        $region20: #{tpu_custom_call.1} parent=11 // pred_fallthru
          _
      $region12: #{tpu_custom_call.1} parent=5 // pred_fallthru
        _
      %p167 = scmp.lt.s32.totalorder %s16, 4
      // Predicated region
      $region21: #{tpu_custom_call.1} parent=5 // pred_check
        %p168 = pneg %p167
      $region22: #{tpu_custom_call.1} parent=5 // pred_check_branch
        %170 = sbr.rel (%p168) target = $region24
      $region23: #{tpu_custom_call.1} parent=5 // pred_region
        // Predicated region
        $region25: #{tpu_custom_call.1} parent=23 // pred_check
          %p171 = pneg %p50
        $region26: #{tpu_custom_call.1} parent=23 // pred_check_branch
          %173 = sbr.rel (%p171) target = $region28
        $region27: #{tpu_custom_call.1} parent=23 // pred_region
          %s174 = sand.u32 %s40, 1
          %s175 = scalar_lea.sflag [#allocation3], %s174
          %s176 = sand.u32 %s40, 1
          %s177 = smul.addr %s176, 256
          %s178 = scalar_lea.vmem [#allocation2], %s177
          %s179 = smul.u32 16, %s24
          %181 = vsyncadd %s175, 0
          %s182 = smul.addr %s179, 2
          %s183 = smul.addr %s23, 64
          %s184 = sadd.s32 %s182, %s183
          %s185 = smul.addr %s184, 8
          %s186 = scalar_lea.hbm %s0, %s185
          %s187 = sshll.u32 %s186, 4
          %s188 = int_to_ptr.hbm [resolvable:$true] %s187
          %s189 = sshll.u32 %s178, 4
          %s190 = int_to_ptr.vmem [resolvable:$true] %s189
          %195 = dma.hbm_to_vmem [thread:$0]  %s188, 4096, %s190, %s175, 256, 256, 16
        $region28: #{tpu_custom_call.1} parent=23 // pred_fallthru
          _
      $region24: #{tpu_custom_call.1} parent=5 // pred_fallthru
        _
      %p196 = scmp.le.s32.totalorder 1, %s16
      %p197 = scmp.lt.s32.totalorder %s16, 5
      %p198 = pnand %p196, %p197
      %p199 = pneg %p198
      // Predicated region
      $region29: #{tpu_custom_call.1} parent=5 // pred_check
        _
      $region30: #{tpu_custom_call.1} parent=5 // pred_check_branch
        %201 = sbr.rel (%p198) target = $region32
      $region31: #{tpu_custom_call.1} parent=5 // pred_region
        %s202 = ssub.s32 %s16, 1
        %s203 = sand.u32 %s43, 1
        %s204 = scalar_lea.sflag [#allocation3], %s203
        %s205 = sand.u32 %s43, 1
        %s206 = smul.addr %s205, 256
        %s207 = scalar_lea.vmem [#allocation2], %s206
        // Predicated region
        $region33: #{tpu_custom_call.1} parent=31 // pred_check
          %p208 = pneg %p56
        $region34: #{tpu_custom_call.1} parent=31 // pred_check_branch
          %210 = sbr.rel (%p208) target = $region36
        $region35: #{tpu_custom_call.1} parent=31 // pred_region
          %212 = dma.done %s204, 4096
        $region36: #{tpu_custom_call.1} parent=31 // pred_fallthru
          _
        // Predicated region
        $region37: #{tpu_custom_call.1} parent=31 // pred_check
          %p213 = pneg %p77
        $region38: #{tpu_custom_call.1} parent=31 // pred_check_branch
          %215 = sbr.rel (%p213) target = $region40
        $region39: #{tpu_custom_call.1} parent=31 // pred_region
          %217 = dma.done [#allocation6], 8192
        $region40: #{tpu_custom_call.1} parent=31 // pred_fallthru
          _
        // Predicated region
        $region41: #{tpu_custom_call.1} parent=31 // pred_check
          %p218 = pneg %p98
        $region42: #{tpu_custom_call.1} parent=31 // pred_check_branch
          %220 = sbr.rel (%p218) target = $region44
        $region43: #{tpu_custom_call.1} parent=31 // pred_region
          %222 = dma.done [#allocation6], 32
        $region44: #{tpu_custom_call.1} parent=31 // pred_fallthru
          _
        %s223 = sand.u32 %s43, 1
        %s224 = scalar_lea.sflag [#allocation3], %s223
        %s225 = sand.u32 %s43, 1
        %s226 = smul.addr %s225, 256
        %s227 = scalar_lea.vmem [#allocation2], %s226
        %p228 = pneg %p56
        %p229 = pneg %p53
        %p230 = pneg %p77
        %p231 = pneg %p74
        %p232 = pneg %p98
        %p233 = pneg %p95
        %p234 = pneg %p126
        %p235 = pneg %p123
        %s236 = sand.u32 %s113, 1
        %s237 = scalar_lea.sflag [#allocation4], %s236
        %s238 = sand.u32 %s113, 1
        %s239 = smul.addr %s238, 256
        %s240 = scalar_lea.vmem [#allocation8], %s239
        %s241 = smul.u32 16, %s26
        %s242 = smul.u32 16, %s26
        %v243 = vld [vmem:[%s207] sm:$0xff]
        %v244 = vld [vmem:[%s207 + $0x8] sm:$0xff]
        %v245 = vld [vmem:[%s207 + $0x10] sm:$0xff]
        %v246 = vld [vmem:[%s207 + $0x18] sm:$0xff]
        %v247 = vld [vmem:[%s207 + $0x20] sm:$0xff]
        %v248 = vld [vmem:[%s207 + $0x28] sm:$0xff]
        %v249 = vld [vmem:[%s207 + $0x30] sm:$0xff]
        %v250 = vld [vmem:[%s207 + $0x38] sm:$0xff]
        %v251 = vld [vmem:[%s207 + $0x40] sm:$0xff]
        %v252 = vld [vmem:[%s207 + $0x48] sm:$0xff]
        %v253 = vld [vmem:[%s207 + $0x50] sm:$0xff]
        %v254 = vld [vmem:[%s207 + $0x58] sm:$0xff]
        %v255 = vld [vmem:[%s207 + $0x60] sm:$0xff]
        %v256 = vld [vmem:[%s207 + $0x68] sm:$0xff]
        %v257 = vld [vmem:[%s207 + $0x70] sm:$0xff]
        %v258 = vld [vmem:[%s207 + $0x78] sm:$0xff]
        %v259 = vld [vmem:[%s207 + $0x80] sm:$0xff]
        %v260 = vld [vmem:[%s207 + $0x88] sm:$0xff]
        %v261 = vld [vmem:[%s207 + $0x90] sm:$0xff]
        %v262 = vld [vmem:[%s207 + $0x98] sm:$0xff]
        %v263 = vld [vmem:[%s207 + $0xa0] sm:$0xff]
        %v264 = vld [vmem:[%s207 + $0xa8] sm:$0xff]
        %v265 = vld [vmem:[%s207 + $0xb0] sm:$0xff]
        %v266 = vld [vmem:[%s207 + $0xb8] sm:$0xff]
        %v267 = vld [vmem:[%s207 + $0xc0] sm:$0xff]
        %v268 = vld [vmem:[%s207 + $0xc8] sm:$0xff]
        %v269 = vld [vmem:[%s207 + $0xd0] sm:$0xff]
        %v270 = vld [vmem:[%s207 + $0xd8] sm:$0xff]
        %v271 = vld [vmem:[%s207 + $0xe0] sm:$0xff]
        %v272 = vld [vmem:[%s207 + $0xe8] sm:$0xff]
        %v273 = vld [vmem:[%s207 + $0xf0] sm:$0xff]
        %v274 = vld [vmem:[%s207 + $0xf8] sm:$0xff]
        %v275 = vld [vmem:[#allocation5] sm:$0xff]
        %v276 = vld [vmem:[#allocation5 + $0x8] sm:$0xff]
        %v277 = vld [vmem:[#allocation5 + $0x10] sm:$0xff]
        %v278 = vld [vmem:[#allocation5 + $0x18] sm:$0xff]
        %v279 = vld [vmem:[#allocation5 + $0x20] sm:$0xff]
        %v280 = vld [vmem:[#allocation5 + $0x28] sm:$0xff]
        %v281 = vld [vmem:[#allocation5 + $0x30] sm:$0xff]
        %v282 = vld [vmem:[#allocation5 + $0x38] sm:$0xff]
        %v283 = vld [vmem:[#allocation5 + $0x40] sm:$0xff]
        %v284 = vld [vmem:[#allocation5 + $0x48] sm:$0xff]
        %v285 = vld [vmem:[#allocation5 + $0x50] sm:$0xff]
        %v286 = vld [vmem:[#allocation5 + $0x58] sm:$0xff]
        %v287 = vld [vmem:[#allocation5 + $0x60] sm:$0xff]
        %v288 = vld [vmem:[#allocation5 + $0x68] sm:$0xff]
        %v289 = vld [vmem:[#allocation5 + $0x70] sm:$0xff]
        %v290 = vld [vmem:[#allocation5 + $0x78] sm:$0xff]
        %v291 = vld [vmem:[#allocation5 + $0x80] sm:$0xff]
        %v292 = vld [vmem:[#allocation5 + $0x88] sm:$0xff]
        %v293 = vld [vmem:[#allocation5 + $0x90] sm:$0xff]
        %v294 = vld [vmem:[#allocation5 + $0x98] sm:$0xff]
        %v295 = vld [vmem:[#allocation5 + $0xa0] sm:$0xff]
        %v296 = vld [vmem:[#allocation5 + $0xa8] sm:$0xff]
        %v297 = vld [vmem:[#allocation5 + $0xb0] sm:$0xff]
        %v298 = vld [vmem:[#allocation5 + $0xb8] sm:$0xff]
        %v299 = vld [vmem:[#allocation5 + $0xc0] sm:$0xff]
        %v300 = vld [vmem:[#allocation5 + $0xc8] sm:$0xff]
        %v301 = vld [vmem:[#allocation5 + $0xd0] sm:$0xff]
        %v302 = vld [vmem:[#allocation5 + $0xd8] sm:$0xff]
        %v303 = vld [vmem:[#allocation5 + $0xe0] sm:$0xff]
        %v304 = vld [vmem:[#allocation5 + $0xe8] sm:$0xff]
        %v305 = vld [vmem:[#allocation5 + $0xf0] sm:$0xff]
        %v306 = vld [vmem:[#allocation5 + $0xf8] sm:$0xff]
        %v307 = vld [vmem:[#allocation5 + $0x100] sm:$0xff]
        %v308 = vld [vmem:[#allocation5 + $0x108] sm:$0xff]
        %v309 = vld [vmem:[#allocation5 + $0x110] sm:$0xff]
        %v310 = vld [vmem:[#allocation5 + $0x118] sm:$0xff]
        %v311 = vld [vmem:[#allocation5 + $0x120] sm:$0xff]
        %v312 = vld [vmem:[#allocation5 + $0x128] sm:$0xff]
        %v313 = vld [vmem:[#allocation5 + $0x130] sm:$0xff]
        %v314 = vld [vmem:[#allocation5 + $0x138] sm:$0xff]
        %v315 = vld [vmem:[#allocation5 + $0x140] sm:$0xff]
        %v316 = vld [vmem:[#allocation5 + $0x148] sm:$0xff]
        %v317 = vld [vmem:[#allocation5 + $0x150] sm:$0xff]
        %v318 = vld [vmem:[#allocation5 + $0x158] sm:$0xff]
        %v319 = vld [vmem:[#allocation5 + $0x160] sm:$0xff]
        %v320 = vld [vmem:[#allocation5 + $0x168] sm:$0xff]
        %v321 = vld [vmem:[#allocation5 + $0x170] sm:$0xff]
        %v322 = vld [vmem:[#allocation5 + $0x178] sm:$0xff]
        %v323 = vld [vmem:[#allocation5 + $0x180] sm:$0xff]
        %v324 = vld [vmem:[#allocation5 + $0x188] sm:$0xff]
        %v325 = vld [vmem:[#allocation5 + $0x190] sm:$0xff]
        %v326 = vld [vmem:[#allocation5 + $0x198] sm:$0xff]
        %v327 = vld [vmem:[#allocation5 + $0x1a0] sm:$0xff]
        %v328 = vld [vmem:[#allocation5 + $0x1a8] sm:$0xff]
        %v329 = vld [vmem:[#allocation5 + $0x1b0] sm:$0xff]
        %v330 = vld [vmem:[#allocation5 + $0x1b8] sm:$0xff]
        %v331 = vld [vmem:[#allocation5 + $0x1c0] sm:$0xff]
        %v332 = vld [vmem:[#allocation5 + $0x1c8] sm:$0xff]
        %v333 = vld [vmem:[#allocation5 + $0x1d0] sm:$0xff]
        %v334 = vld [vmem:[#allocation5 + $0x1d8] sm:$0xff]
        %v335 = vld [vmem:[#allocation5 + $0x1e0] sm:$0xff]
        %v336 = vld [vmem:[#allocation5 + $0x1e8] sm:$0xff]
        %v337 = vld [vmem:[#allocation5 + $0x1f0] sm:$0xff]
        %v338 = vld [vmem:[#allocation5 + $0x1f8] sm:$0xff]
        %v339 = vld [vmem:[#allocation7] sm:$0x3]
        %v341 = vperm.slane %v339, 0
        %v342 = vperm.slane %v339, 1
        %345 = vmatpush.msra.mxu0 %v305
        %346 = vmatpush.msra.mxu0 %v303
        %347 = vmatpush.msra.mxu0 %v301
        %348 = vmatpush.msra.mxu0 %v299
        %349 = vmatpush.msra.mxu0 %v297
        %350 = vmatpush.msra.mxu0 %v295
        %351 = vmatpush.msra.mxu0 %v293
        %352 = vmatpush.msra.mxu0 %v291
        %353 = vmatpush.msra.mxu0 %v289
        %354 = vmatpush.msra.mxu0 %v287
        %355 = vmatpush.msra.mxu0 %v285
        %356 = vmatpush.msra.mxu0 %v283
        %357 = vmatpush.msra.mxu0 %v281
        %358 = vmatpush.msra.mxu0 %v279
        %359 = vmatpush.msra.mxu0 %v277
        %360 = vmatpush.msra.mxu0 %v275
        %361 = vmatmul.f32.gmra.mxu0 %v243
        %v362 = vpop.f32.mrf.mxu0
        %v363 = vadd.f32 %v341, %v362
        %364 = vmatmul.f32.gmra.mxu0 %v245
        %v365 = vpop.f32.mrf.mxu0
        %v366 = vadd.f32 %v341, %v365
        %367 = vmatmul.f32.gmra.mxu0 %v247
        %v368 = vpop.f32.mrf.mxu0
        %v369 = vadd.f32 %v341, %v368
        %370 = vmatmul.f32.gmra.mxu0 %v249
        %v371 = vpop.f32.mrf.mxu0
        %v372 = vadd.f32 %v341, %v371
        %373 = vmatmul.f32.gmra.mxu0 %v251
        %v374 = vpop.f32.mrf.mxu0
        %v375 = vadd.f32 %v341, %v374
        %376 = vmatmul.f32.gmra.mxu0 %v253
        %v377 = vpop.f32.mrf.mxu0
        %v378 = vadd.f32 %v341, %v377
        %379 = vmatmul.f32.gmra.mxu0 %v255
        %v380 = vpop.f32.mrf.mxu0
        %v381 = vadd.f32 %v341, %v380
        %382 = vmatmul.f32.gmra.mxu0 %v257
        %v383 = vpop.f32.mrf.mxu0
        %v384 = vadd.f32 %v341, %v383
        %385 = vmatmul.f32.gmra.mxu0 %v259
        %v386 = vpop.f32.mrf.mxu0
        %v387 = vadd.f32 %v341, %v386
        %388 = vmatmul.f32.gmra.mxu0 %v261
        %v389 = vpop.f32.mrf.mxu0
        %v390 = vadd.f32 %v341, %v389
        %391 = vmatmul.f32.gmra.mxu0 %v263
        %v392 = vpop.f32.mrf.mxu0
        %v393 = vadd.f32 %v341, %v392
        %394 = vmatmul.f32.gmra.mxu0 %v265
        %v395 = vpop.f32.mrf.mxu0
        %v396 = vadd.f32 %v341, %v395
        %397 = vmatmul.f32.gmra.mxu0 %v267
        %v398 = vpop.f32.mrf.mxu0
        %v399 = vadd.f32 %v341, %v398
        %400 = vmatmul.f32.gmra.mxu0 %v269
        %v401 = vpop.f32.mrf.mxu0
        %v402 = vadd.f32 %v341, %v401
        %403 = vmatmul.f32.gmra.mxu0 %v271
        %v404 = vpop.f32.mrf.mxu0
        %v405 = vadd.f32 %v341, %v404
        %406 = vmatmul.f32.gmra.mxu0 %v273
        %v407 = vpop.f32.mrf.mxu0
        %v408 = vadd.f32 %v341, %v407
        %409 = vdwg.mxu0
        %410 = vmatpush.msra.mxu0 %v337
        %411 = vmatpush.msra.mxu0 %v335
        %412 = vmatpush.msra.mxu0 %v333
        %413 = vmatpush.msra.mxu0 %v331
        %414 = vmatpush.msra.mxu0 %v329
        %415 = vmatpush.msra.mxu0 %v327
        %416 = vmatpush.msra.mxu0 %v325
        %417 = vmatpush.msra.mxu0 %v323
        %418 = vmatpush.msra.mxu0 %v321
        %419 = vmatpush.msra.mxu0 %v319
        %420 = vmatpush.msra.mxu0 %v317
        %421 = vmatpush.msra.mxu0 %v315
        %422 = vmatpush.msra.mxu0 %v313
        %423 = vmatpush.msra.mxu0 %v311
        %424 = vmatpush.msra.mxu0 %v309
        %425 = vmatpush.msra.mxu0 %v307
        %426 = vmatmul.f32.gmra.mxu0 %v244
        %v427 = vpop.f32.mrf.mxu0
        %v428 = vadd.f32 %v363, %v427
        %429 = vmatmul.f32.gmra.mxu0 %v246
        %v430 = vpop.f32.mrf.mxu0
        %v431 = vadd.f32 %v366, %v430
        %432 = vmatmul.f32.gmra.mxu0 %v248
        %v433 = vpop.f32.mrf.mxu0
        %v434 = vadd.f32 %v369, %v433
        %435 = vmatmul.f32.gmra.mxu0 %v250
        %v436 = vpop.f32.mrf.mxu0
        %v437 = vadd.f32 %v372, %v436
        %438 = vmatmul.f32.gmra.mxu0 %v252
        %v439 = vpop.f32.mrf.mxu0
        %v440 = vadd.f32 %v375, %v439
        %441 = vmatmul.f32.gmra.mxu0 %v254
        %v442 = vpop.f32.mrf.mxu0
        %v443 = vadd.f32 %v378, %v442
        %444 = vmatmul.f32.gmra.mxu0 %v256
        %v445 = vpop.f32.mrf.mxu0
        %v446 = vadd.f32 %v381, %v445
        %447 = vmatmul.f32.gmra.mxu0 %v258
        %v448 = vpop.f32.mrf.mxu0
        %v449 = vadd.f32 %v384, %v448
        %450 = vmatmul.f32.gmra.mxu0 %v260
        %v451 = vpop.f32.mrf.mxu0
        %v452 = vadd.f32 %v387, %v451
        %453 = vmatmul.f32.gmra.mxu0 %v262
        %v454 = vpop.f32.mrf.mxu0
        %v455 = vadd.f32 %v390, %v454
        %456 = vmatmul.f32.gmra.mxu0 %v264
        %v457 = vpop.f32.mrf.mxu0
        %v458 = vadd.f32 %v393, %v457
        %459 = vmatmul.f32.gmra.mxu0 %v266
        %v460 = vpop.f32.mrf.mxu0
        %v461 = vadd.f32 %v396, %v460
        %462 = vmatmul.f32.gmra.mxu0 %v268
        %v463 = vpop.f32.mrf.mxu0
        %v464 = vadd.f32 %v399, %v463
        %465 = vmatmul.f32.gmra.mxu0 %v270
        %v466 = vpop.f32.mrf.mxu0
        %v467 = vadd.f32 %v402, %v466
        %468 = vmatmul.f32.gmra.mxu0 %v272
        %v469 = vpop.f32.mrf.mxu0
        %v470 = vadd.f32 %v405, %v469
        %471 = vmatmul.f32.gmra.mxu0 %v274
        %v472 = vpop.f32.mrf.mxu0
        %v473 = vadd.f32 %v408, %v472
        %474 = vdwg.mxu0
        %475 = vmatpush.msra.mxu0 %v306
        %476 = vmatpush.msra.mxu0 %v304
        %477 = vmatpush.msra.mxu0 %v302
        %478 = vmatpush.msra.mxu0 %v300
        %479 = vmatpush.msra.mxu0 %v298
        %480 = vmatpush.msra.mxu0 %v296
        %481 = vmatpush.msra.mxu0 %v294
        %482 = vmatpush.msra.mxu0 %v292
        %483 = vmatpush.msra.mxu0 %v290
        %484 = vmatpush.msra.mxu0 %v288
        %485 = vmatpush.msra.mxu0 %v286
        %486 = vmatpush.msra.mxu0 %v284
        %487 = vmatpush.msra.mxu0 %v282
        %488 = vmatpush.msra.mxu0 %v280
        %489 = vmatpush.msra.mxu0 %v278
        %490 = vmatpush.msra.mxu0 %v276
        %491 = vmatmul.f32.gmra.mxu0 %v243
        %v492 = vpop.f32.mrf.mxu0
        %v493 = vadd.f32 %v342, %v492
        %494 = vmatmul.f32.gmra.mxu0 %v245
        %v495 = vpop.f32.mrf.mxu0
        %v496 = vadd.f32 %v342, %v495
        %497 = vmatmul.f32.gmra.mxu0 %v247
        %v498 = vpop.f32.mrf.mxu0
        %v499 = vadd.f32 %v342, %v498
        %500 = vmatmul.f32.gmra.mxu0 %v249
        %v501 = vpop.f32.mrf.mxu0
        %v502 = vadd.f32 %v342, %v501
        %503 = vmatmul.f32.gmra.mxu0 %v251
        %v504 = vpop.f32.mrf.mxu0
        %v505 = vadd.f32 %v342, %v504
        %506 = vmatmul.f32.gmra.mxu0 %v253
        %v507 = vpop.f32.mrf.mxu0
        %v508 = vadd.f32 %v342, %v507
        %509 = vmatmul.f32.gmra.mxu0 %v255
        %v510 = vpop.f32.mrf.mxu0
        %v511 = vadd.f32 %v342, %v510
        %512 = vmatmul.f32.gmra.mxu0 %v257
        %v513 = vpop.f32.mrf.mxu0
        %v514 = vadd.f32 %v342, %v513
        %515 = vmatmul.f32.gmra.mxu0 %v259
        %v516 = vpop.f32.mrf.mxu0
        %v517 = vadd.f32 %v342, %v516
        %518 = vmatmul.f32.gmra.mxu0 %v261
        %v519 = vpop.f32.mrf.mxu0
        %v520 = vadd.f32 %v342, %v519
        %521 = vmatmul.f32.gmra.mxu0 %v263
        %v522 = vpop.f32.mrf.mxu0
        %v523 = vadd.f32 %v342, %v522
        %524 = vmatmul.f32.gmra.mxu0 %v265
        %v525 = vpop.f32.mrf.mxu0
        %v526 = vadd.f32 %v342, %v525
        %527 = vmatmul.f32.gmra.mxu0 %v267
        %v528 = vpop.f32.mrf.mxu0
        %v529 = vadd.f32 %v342, %v528
        %530 = vmatmul.f32.gmra.mxu0 %v269
        %v531 = vpop.f32.mrf.mxu0
        %v532 = vadd.f32 %v342, %v531
        %533 = vmatmul.f32.gmra.mxu0 %v271
        %v534 = vpop.f32.mrf.mxu0
        %v535 = vadd.f32 %v342, %v534
        %536 = vmatmul.f32.gmra.mxu0 %v273
        %v537 = vpop.f32.mrf.mxu0
        %v538 = vadd.f32 %v342, %v537
        %539 = vdwg.mxu0
        %540 = vmatpush.msra.mxu0 %v338
        %541 = vmatpush.msra.mxu0 %v336
        %542 = vmatpush.msra.mxu0 %v334
        %543 = vmatpush.msra.mxu0 %v332
        %544 = vmatpush.msra.mxu0 %v330
        %545 = vmatpush.msra.mxu0 %v328
        %546 = vmatpush.msra.mxu0 %v326
        %547 = vmatpush.msra.mxu0 %v324
        %548 = vmatpush.msra.mxu0 %v322
        %549 = vmatpush.msra.mxu0 %v320
        %550 = vmatpush.msra.mxu0 %v318
        %551 = vmatpush.msra.mxu0 %v316
        %552 = vmatpush.msra.mxu0 %v314
        %553 = vmatpush.msra.mxu0 %v312
        %554 = vmatpush.msra.mxu0 %v310
        %555 = vmatpush.msra.mxu0 %v308
        %556 = vmatmul.f32.gmra.mxu0 %v244
        %v557 = vpop.f32.mrf.mxu0
        %v558 = vadd.f32 %v493, %v557
        %559 = vmatmul.f32.gmra.mxu0 %v246
        %v560 = vpop.f32.mrf.mxu0
        %v561 = vadd.f32 %v496, %v560
        %562 = vmatmul.f32.gmra.mxu0 %v248
        %v563 = vpop.f32.mrf.mxu0
        %v564 = vadd.f32 %v499, %v563
        %565 = vmatmul.f32.gmra.mxu0 %v250
        %v566 = vpop.f32.mrf.mxu0
        %v567 = vadd.f32 %v502, %v566
        %568 = vmatmul.f32.gmra.mxu0 %v252
        %v569 = vpop.f32.mrf.mxu0
        %v570 = vadd.f32 %v505, %v569
        %571 = vmatmul.f32.gmra.mxu0 %v254
        %v572 = vpop.f32.mrf.mxu0
        %v573 = vadd.f32 %v508, %v572
        %574 = vmatmul.f32.gmra.mxu0 %v256
        %v575 = vpop.f32.mrf.mxu0
        %v576 = vadd.f32 %v511, %v575
        %577 = vmatmul.f32.gmra.mxu0 %v258
        %v578 = vpop.f32.mrf.mxu0
        %v579 = vadd.f32 %v514, %v578
        %580 = vmatmul.f32.gmra.mxu0 %v260
        %v581 = vpop.f32.mrf.mxu0
        %v582 = vadd.f32 %v517, %v581
        %583 = vmatmul.f32.gmra.mxu0 %v262
        %v584 = vpop.f32.mrf.mxu0
        %v585 = vadd.f32 %v520, %v584
        %586 = vmatmul.f32.gmra.mxu0 %v264
        %v587 = vpop.f32.mrf.mxu0
        %v588 = vadd.f32 %v523, %v587
        %589 = vmatmul.f32.gmra.mxu0 %v266
        %v590 = vpop.f32.mrf.mxu0
        %v591 = vadd.f32 %v526, %v590
        %592 = vmatmul.f32.gmra.mxu0 %v268
        %v593 = vpop.f32.mrf.mxu0
        %v594 = vadd.f32 %v529, %v593
        %595 = vmatmul.f32.gmra.mxu0 %v270
        %v596 = vpop.f32.mrf.mxu0
        %v597 = vadd.f32 %v532, %v596
        %598 = vmatmul.f32.gmra.mxu0 %v272
        %v599 = vpop.f32.mrf.mxu0
        %v600 = vadd.f32 %v535, %v599
        %601 = vmatmul.f32.gmra.mxu0 %v274
        %v602 = vpop.f32.mrf.mxu0
        %v603 = vadd.f32 %v538, %v602
        %604 = vdwg.mxu0
        %605 = vst [vmem:[%s240] sm:$0xff] %v428
        %606 = vst [vmem:[%s240 + $0x8] sm:$0xff] %v558
        %607 = vst [vmem:[%s240 + $0x10] sm:$0xff] %v431
        %608 = vst [vmem:[%s240 + $0x18] sm:$0xff] %v561
        %609 = vst [vmem:[%s240 + $0x20] sm:$0xff] %v434
        %610 = vst [vmem:[%s240 + $0x28] sm:$0xff] %v564
        %611 = vst [vmem:[%s240 + $0x30] sm:$0xff] %v437
        %612 = vst [vmem:[%s240 + $0x38] sm:$0xff] %v567
        %613 = vst [vmem:[%s240 + $0x40] sm:$0xff] %v440
        %614 = vst [vmem:[%s240 + $0x48] sm:$0xff] %v570
        %615 = vst [vmem:[%s240 + $0x50] sm:$0xff] %v443
        %616 = vst [vmem:[%s240 + $0x58] sm:$0xff] %v573
        %617 = vst [vmem:[%s240 + $0x60] sm:$0xff] %v446
        %618 = vst [vmem:[%s240 + $0x68] sm:$0xff] %v576
        %619 = vst [vmem:[%s240 + $0x70] sm:$0xff] %v449
        %620 = vst [vmem:[%s240 + $0x78] sm:$0xff] %v579
        %621 = vst [vmem:[%s240 + $0x80] sm:$0xff] %v452
        %622 = vst [vmem:[%s240 + $0x88] sm:$0xff] %v582
        %623 = vst [vmem:[%s240 + $0x90] sm:$0xff] %v455
        %624 = vst [vmem:[%s240 + $0x98] sm:$0xff] %v585
        %625 = vst [vmem:[%s240 + $0xa0] sm:$0xff] %v458
        %626 = vst [vmem:[%s240 + $0xa8] sm:$0xff] %v588
        %627 = vst [vmem:[%s240 + $0xb0] sm:$0xff] %v461
        %628 = vst [vmem:[%s240 + $0xb8] sm:$0xff] %v591
        %629 = vst [vmem:[%s240 + $0xc0] sm:$0xff] %v464
        %630 = vst [vmem:[%s240 + $0xc8] sm:$0xff] %v594
        %631 = vst [vmem:[%s240 + $0xd0] sm:$0xff] %v467
        %632 = vst [vmem:[%s240 + $0xd8] sm:$0xff] %v597
        %633 = vst [vmem:[%s240 + $0xe0] sm:$0xff] %v470
        %634 = vst [vmem:[%s240 + $0xe8] sm:$0xff] %v600
        %635 = vst [vmem:[%s240 + $0xf0] sm:$0xff] %v473
        %636 = vst [vmem:[%s240 + $0xf8] sm:$0xff] %v603
        %s637 = sand.u32 %s113, 1
        %s638 = scalar_lea.sflag [#allocation4], %s637
        %s639 = sand.u32 %s113, 1
        %s640 = smul.addr %s639, 256
        %s641 = scalar_lea.vmem [#allocation8], %s640
        // Predicated region
        $region45: #{tpu_custom_call.1} parent=31 // pred_check
          %p642 = pneg %p123
        $region46: #{tpu_custom_call.1} parent=31 // pred_check_branch
          %644 = sbr.rel (%p642) target = $region48
        $region47: #{tpu_custom_call.1} parent=31 // pred_region
          %s645 = smul.u32 16, %s26
          %647 = vsyncadd %s638, 0
          %s648 = smul.addr %s645, 2
          %s649 = smul.addr %s25, 64
          %s650 = sadd.s32 %s648, %s649
          %s651 = smul.addr %s650, 8
          %s652 = scalar_lea.hbm %s3, %s651
          %s653 = sshll.u32 %s641, 4
          %s654 = int_to_ptr.vmem [resolvable:$true] %s653
          %s655 = sshll.u32 %s652, 4
          %s656 = int_to_ptr.hbm [resolvable:$true] %s655
          %661 = dma.vmem_to_hbm [thread:$0]  %s654, 4096, %s656, %s638, 256, 256, 16
        $region48: #{tpu_custom_call.1} parent=31 // pred_fallthru
          _
      $region32: #{tpu_custom_call.1} parent=5 // pred_fallthru
        _
      %p662 = scmp.le.s32.totalorder 2, %s16
      // Predicated region
      $region49: #{tpu_custom_call.1} parent=5 // pred_check
        %p663 = pneg %p662
      $region50: #{tpu_custom_call.1} parent=5 // pred_check_branch
        %665 = sbr.rel (%p663) target = $region52
      $region51: #{tpu_custom_call.1} parent=5 // pred_region
        %s666 = ssub.s32 %s16, 2
        // Predicated region
        $region53: #{tpu_custom_call.1} parent=51 // pred_check
          %p667 = pneg %p129
        $region54: #{tpu_custom_call.1} parent=51 // pred_check_branch
          %669 = sbr.rel (%p667) target = $region56
        $region55: #{tpu_custom_call.1} parent=51 // pred_region
          %s670 = sand.u32 %s114, 1
          %s671 = scalar_lea.sflag [#allocation4], %s670
          %s672 = sand.u32 %s114, 1
          %s673 = smul.addr %s672, 256
          %s674 = scalar_lea.vmem [#allocation8], %s673
          %676 = dma.done %s671, 4096
        $region56: #{tpu_custom_call.1} parent=51 // pred_fallthru
          _
      $region52: #{tpu_custom_call.1} parent=5 // pred_fallthru
        _
    $region6: #{tpu_custom_call.1} parent=1 // loop_footer
      %s20 = sadd.s32 1, %s16
    $region7: #{tpu_custom_call.1} parent=1 // loop_footer_branch
      %15 = sbr.rel target = $region3
    $region8: #{tpu_custom_call.1} parent=1 // loop_exit
      _
    %677 = vsyncpa [#allocation3], 1
    %s678 = scalar_lea.sflag [#allocation3], 1
    %679 = vsyncpa %s678, 1
    %680 = vsyncpa [#allocation6], 1
    %681 = vsyncpa [#allocation4], 1
    %s682 = scalar_lea.sflag [#allocation4], 1
    %683 = vsyncpa %s682, 1

</llo_original>
